<compile_context>
chip_gen: v5e
topology: v5e:2x2
jax: 0.10.0
libtpu: 0.0.40
codegen_flags: <defaults>
</compile_context>

<pallas_src>
import functools

import jax
import jax.numpy as jnp
from jax.experimental import pallas as pl
from jax.experimental.pallas import tpu as pltpu


def _fused_mlp_kernel(x_ref, *refs, num_layers):
    """Fused LinearNet forward for one batch tile.

    refs = (w0, b0, w1, b1, ..., w_{L-1}, b_{L-1}, o_ref)
    Each layer: h = relu(h @ w + b).  Dropout is identity (eval mode).
    """
    o_ref = refs[-1]
    params = refs[:-1]
    h = x_ref[...]
    for li in range(num_layers):
        w = params[2 * li][...]
        b = params[2 * li + 1][...]
        h = jnp.dot(h, w, preferred_element_type=jnp.float32) + b
        h = jnp.maximum(h, 0.0)  # ReLU on VPU; hidden under MXU/DMA bundle slots
    o_ref[...] = h.astype(o_ref.dtype)


def linear_net_forward(x, params, *, block_b=512):
    """LinearNet.forward: sequential (dropout->linear->relu) blocks, fused.

    x: (B, Fin) f32; params: list of (w, b) with w (Fin_i, Fout_i), b (Fout_i,)
    Returns (B, Fout_last) f32.
    """
    B, f_in = x.shape
    num_layers = len(params)
    f_out = params[-1][0].shape[1]

    # Batch tile: multiple of 8 (sublane), capped at block_b.  For scaled-up
    # models, cap TB against the 64 MiB VMEM of v7x (resident weights +
    # double-buffered activation tiles); at these widths default limits suffice.
    tb = min(block_b, max(8, pl.cdiv(B, 8) * 8))
    b_pad = pl.cdiv(B, tb) * tb
    if b_pad != B:
        x = jnp.pad(x, ((0, b_pad - B), (0, 0)))

    in_specs = [pl.BlockSpec((tb, f_in), lambda i: (i, 0))]
    flat_params = []
    for w, b in params:
        fi, fo = w.shape
        # Full-block, constant index_map -> weights/biases stay VMEM-resident.
        in_specs.append(pl.BlockSpec((fi, fo), lambda i: (0, 0)))
        in_specs.append(pl.BlockSpec((1, fo), lambda i: (0, 0)))
        flat_params.append(w)
        flat_params.append(b.reshape(1, fo))

    kernel = functools.partial(_fused_mlp_kernel, num_layers=num_layers)
    out = pl.pallas_call(
        kernel,
        out_shape=jax.ShapeDtypeStruct((b_pad, f_out), jnp.float32),
        grid_spec=pltpu.PrefetchScalarGridSpec(
            num_scalar_prefetch=0,
            grid=(b_pad // tb,),
            in_specs=in_specs,
            out_specs=pl.BlockSpec((tb, f_out), lambda i: (i, 0)),
        ),
        compiler_params=pltpu.CompilerParams(
            # Independent batch tiles -> shard across TensorCores (v7x megacore).
            dimension_semantics=("parallel",),
        ),
    )(x, *flat_params)
    return out[:B]


def init_linear_net_params(key, num_inputs, num_hiddens):
    """Deterministic torch.nn.Linear-style init: U(-1/sqrt(fan_in), 1/sqrt(fan_in)).

    Weights stored pre-transposed as (in_features, out_features).
    """
    params = []
    dims = [num_inputs] + list(num_hiddens)
    for i in range(len(num_hiddens)):
        fan_in, fan_out = dims[i], dims[i + 1]
        key, kw, kb = jax.random.split(key, 3)
        bound = 1.0 / jnp.sqrt(fan_in)
        w = jax.random.uniform(kw, (fan_in, fan_out), jnp.float32, -bound, bound)
        b = jax.random.uniform(kb, (fan_out,), jnp.float32, -bound, bound)
        params.append((w, b))
    return params


if __name__ == "__main__":
    key = jax.random.PRNGKey(0)
    B = 8
    num_inputs = 32
    # Last hidden = 128 keeps the final output lane-dense (full 128-lane stores).
    num_hiddens = [64, 128]
    dropout_list = [0.1, 0.2]  # unused at inference (eval-mode identity)

    kx, kp = jax.random.split(key)
    x = jax.random.normal(kx, (B, num_inputs), jnp.float32)
    params = init_linear_net_params(kp, num_inputs, num_hiddens)

    y = linear_net_forward(x, params)
    jax.block_until_ready(y)

    # sanity check against pure-JAX reference (dropout = identity in eval mode)
    ref = x
    for w, b in params:
        ref = jnp.maximum(ref @ w + b, 0.0)
    assert y.shape == (B, num_hiddens[-1])
    assert jnp.allclose(y, ref, atol=1e-5, rtol=1e-5)

    print("KERNEL_OK")
</pallas_src>

<mosaic_0001>
module attributes {stable_mosaic.version = 11 : i64} {
  func.func @_fused_mlp_kernel(%arg0: i32, %arg1: memref<8x32xf32, #tpu.memory_space<vmem>>, %arg2: memref<32x64xf32, #tpu.memory_space<vmem>>, %arg3: memref<1x64xf32, #tpu.memory_space<vmem>>, %arg4: memref<64x128xf32, #tpu.memory_space<vmem>>, %arg5: memref<1x128xf32, #tpu.memory_space<vmem>>, %arg6: memref<8x128xf32, #tpu.memory_space<vmem>>) attributes {dimension_semantics = [#tpu.dimension_semantics<parallel>], iteration_bounds = array<i64: 1>, scalar_prefetch = 0 : i64, scratch_operands = 0 : i64, tpu.core_type = #tpu.core_type<tc>, window_params = [{transform_indices = @transform_0, window_bounds = array<i64: 8, 32>}, {pipeline_mode = #tpu.pipeline_mode<synchronous>, transform_indices = @transform_1, window_bounds = array<i64: 32, 64>}, {pipeline_mode = #tpu.pipeline_mode<synchronous>, transform_indices = @transform_2, window_bounds = array<i64: 1, 64>}, {pipeline_mode = #tpu.pipeline_mode<synchronous>, transform_indices = @transform_3, window_bounds = array<i64: 64, 128>}, {pipeline_mode = #tpu.pipeline_mode<synchronous>, transform_indices = @transform_4, window_bounds = array<i64: 1, 128>}, {transform_indices = @transform_5, window_bounds = array<i64: 8, 128>}]} {
    %c0 = arith.constant 0 : index
    %c0_0 = arith.constant 0 : index
    %0 = vector.load %arg1[%c0, %c0_0] : memref<8x32xf32, #tpu.memory_space<vmem>>, vector<8x32xf32>
    %c0_1 = arith.constant 0 : index
    %c0_2 = arith.constant 0 : index
    %1 = vector.load %arg2[%c0_1, %c0_2] : memref<32x64xf32, #tpu.memory_space<vmem>>, vector<32x64xf32>
    %c0_3 = arith.constant 0 : index
    %c0_4 = arith.constant 0 : index
    %2 = vector.load %arg3[%c0_3, %c0_4] : memref<1x64xf32, #tpu.memory_space<vmem>>, vector<1x64xf32>
    %cst = arith.constant dense<0.000000e+00> : vector<8x64xf32>
    %3 = tpu.matmul %0, %1, %cst {dimension_numbers = #tpu.dot_dimension_numbers<[1], [0], [0], [1], [0, 0, 1, 1], [], []>} : vector<8x32xf32>, vector<32x64xf32>, vector<8x64xf32> -> vector<8x64xf32>
    %4 = vector.broadcast %2 : vector<1x64xf32> to vector<8x64xf32>
    %5 = arith.addf %3, %4 : vector<8x64xf32>
    %cst_5 = arith.constant 0.000000e+00 : f32
    %6 = vector.broadcast %cst_5 : f32 to vector<8x64xf32>
    %7 = arith.maximumf %5, %6 : vector<8x64xf32>
    %c0_6 = arith.constant 0 : index
    %c0_7 = arith.constant 0 : index
    %8 = vector.load %arg4[%c0_6, %c0_7] : memref<64x128xf32, #tpu.memory_space<vmem>>, vector<64x128xf32>
    %c0_8 = arith.constant 0 : index
    %c0_9 = arith.constant 0 : index
    %9 = vector.load %arg5[%c0_8, %c0_9] : memref<1x128xf32, #tpu.memory_space<vmem>>, vector<1x128xf32>
    %cst_10 = arith.constant dense<0.000000e+00> : vector<8x128xf32>
    %10 = tpu.matmul %7, %8, %cst_10 {dimension_numbers = #tpu.dot_dimension_numbers<[1], [0], [0], [1], [0, 0, 1, 1], [], []>} : vector<8x64xf32>, vector<64x128xf32>, vector<8x128xf32> -> vector<8x128xf32>
    %11 = vector.broadcast %9 : vector<1x128xf32> to vector<8x128xf32>
    %12 = arith.addf %10, %11 : vector<8x128xf32>
    %cst_11 = arith.constant 0.000000e+00 : f32
    %13 = vector.broadcast %cst_11 : f32 to vector<8x128xf32>
    %14 = arith.maximumf %12, %13 : vector<8x128xf32>
    %c0_12 = arith.constant 0 : index
    %c0_13 = arith.constant 0 : index
    %15 = vector.load %arg6[%c0_12, %c0_13] : memref<8x128xf32, #tpu.memory_space<vmem>>, vector<8x128xf32>
    tpu.vector_store %arg6[%c0_12, %c0_13], %14 {strides = array<i32>} : memref<8x128xf32, #tpu.memory_space<vmem>>, vector<8x128xf32>,
    return
  }
  func.func @transform_0(%arg0: i32) -> (i32, i32) {
    %c0_i32 = arith.constant 0 : i32
    %c0_i32_0 = arith.constant 0 : i32
    return %arg0, %c0_i32 : i32, i32
  }
  func.func @transform_1(%arg0: i32) -> (i32, i32) {
    %c0_i32 = arith.constant 0 : i32
    %c0_i32_0 = arith.constant 0 : i32
    %c0_i32_1 = arith.constant 0 : i32
    return %c0_i32, %c0_i32_0 : i32, i32
  }
  func.func @transform_2(%arg0: i32) -> (i32, i32) {
    %c0_i32 = arith.constant 0 : i32
    %c0_i32_0 = arith.constant 0 : i32
    %c0_i32_1 = arith.constant 0 : i32
    return %c0_i32, %c0_i32_0 : i32, i32
  }
  func.func @transform_3(%arg0: i32) -> (i32, i32) {
    %c0_i32 = arith.constant 0 : i32
    %c0_i32_0 = arith.constant 0 : i32
    %c0_i32_1 = arith.constant 0 : i32
    return %c0_i32, %c0_i32_0 : i32, i32
  }
  func.func @transform_4(%arg0: i32) -> (i32, i32) {
    %c0_i32 = arith.constant 0 : i32
    %c0_i32_0 = arith.constant 0 : i32
    %c0_i32_1 = arith.constant 0 : i32
    return %c0_i32, %c0_i32_0 : i32, i32
  }
  func.func @transform_5(%arg0: i32) -> (i32, i32) {
    %c0_i32 = arith.constant 0 : i32
    %c0_i32_0 = arith.constant 0 : i32
    return %arg0, %c0_i32 : i32, i32
  }
}

</mosaic_0001>

<llo_original>
// kernel: tpu_custom_call.1
$region0: #{tpu_custom_call.1}
  #allocation0 [shape = 'u32[]', space=smem, size = 0x4, offset = 0x4, fixed_abs, tag = 'smem constant byte address 0x4 - core index']
  #allocation1 [shape = 'u32[72,128]{1,0:T(1,128)}', space=vmem, size = 0x9000, scoped, tag = 'internal scratch']
  %s0 = inlined_call_operand.hbm [shape: f32[8,32], index: 0, kind: input, shape index: {}]
  %s1 = inlined_call_operand.hbm [shape: f32[32,64], index: 1, kind: input, shape index: {}]
  %s2 = inlined_call_operand.vmem [shape: f32[1,64], index: 2, kind: input, shape index: {}]
  %s3 = inlined_call_operand.hbm [shape: f32[64,128], index: 3, kind: input, shape index: {}]
  %s4 = inlined_call_operand.vmem [shape: f32[1,128], index: 4, kind: input, shape index: {}]
  %s5 = inlined_call_operand.hbm [shape: f32[8,128], index: 5, kind: output, shape index: {}]
  %s6 = sld [smem:[#allocation0]]
  $region42: #{tpu_custom_call.1} parent=0
    _
  %s8 = ssub.s32 1, %s6
  %s9 = scalar_select 0, %s8, %s6
  $region1: #{tpu_custom_call.1} parent=0
    #allocation2 [shape = 'u8[4096]{0}', space=vmem, size = 0x1000, scoped, tag = 'input window, operand 0, single buffered']
    #allocation3 [shape = 's32[1]{0}', space=sflag, size = 0x4, scoped, tag = 'scoped memory for tpu_custom_call.1']
    #allocation4 [shape = 's32[1]{0}', space=sflag, size = 0x4, scoped, tag = 'scoped memory for tpu_custom_call.1']
    #allocation5 [shape = 'u8[16384]{0}', space=vmem, size = 0x4000, scoped, tag = 'input window, operand 1, single buffered']
    #allocation6 [shape = 's32[1]{0}', space=sflag, size = 0x4, scoped, tag = 'scoped memory for tpu_custom_call.1']
    #allocation7 [shape = 'u8[32768]{0}', space=vmem, size = 0x8000, scoped, tag = 'input window, operand 3, single buffered']
    #allocation8 [shape = 'u8[4096]{0}', space=vmem, size = 0x1000, scoped, tag = 'output window, operand 0, single buffered']
    %10 = vsyncpa [#allocation3], 0
    %11 = vsyncpa [#allocation6], 0
    %12 = vsyncpa [#allocation4], 0
    // Predicated region
    $region2: #{tpu_custom_call.1} parent=1 // pred_check
      _
    $region3: #{tpu_custom_call.1} parent=1 // pred_check_branch
      %14 = sbr.rel (0) target = $region5
    $region4: #{tpu_custom_call.1} parent=1 // pred_region
      %16 = vsyncadd [#allocation3], 0
      %s18 = sshll.u32 %s0, 4
      %s19 = int_to_ptr.hbm [resolvable:$true] %s18
      %s20 = sshll.u32 [#allocation2], 4
      %s21 = int_to_ptr.vmem [resolvable:$true] %s20
      %23 = dma.hbm_to_vmem [thread:$0]  %s19, 128, %s21, [#allocation3]
    $region5: #{tpu_custom_call.1} parent=1 // pred_fallthru
      _
    // Predicated region
    $region6: #{tpu_custom_call.1} parent=1 // pred_check
      _
    $region7: #{tpu_custom_call.1} parent=1 // pred_check_branch
      %25 = sbr.rel (0) target = $region9
    $region8: #{tpu_custom_call.1} parent=1 // pred_region
      %27 = vsyncadd [#allocation6], 0
      %s28 = sshll.u32 %s1, 4
      %s29 = int_to_ptr.hbm [resolvable:$true] %s28
      %s30 = sshll.u32 [#allocation5], 4
      %s31 = int_to_ptr.vmem [resolvable:$true] %s30
      %36 = dma.hbm_to_vmem [thread:$0]  %s29, 512, %s31, [#allocation6], 128, 128, 8
    $region9: #{tpu_custom_call.1} parent=1 // pred_fallthru
      _
    // Predicated region
    $region10: #{tpu_custom_call.1} parent=1 // pred_check
      _
    $region11: #{tpu_custom_call.1} parent=1 // pred_check_branch
      %38 = sbr.rel (0) target = $region13
    $region12: #{tpu_custom_call.1} parent=1 // pred_region
      _
    $region13: #{tpu_custom_call.1} parent=1 // pred_fallthru
      _
    // Predicated region
    $region14: #{tpu_custom_call.1} parent=1 // pred_check
      _
    $region15: #{tpu_custom_call.1} parent=1 // pred_check_branch
      %40 = sbr.rel (0) target = $region17
    $region16: #{tpu_custom_call.1} parent=1 // pred_region
      %42 = vsyncadd [#allocation6], 0
      %s43 = sshll.u32 %s3, 4
      %s44 = int_to_ptr.hbm [resolvable:$true] %s43
      %s45 = sshll.u32 [#allocation7], 4
      %s46 = int_to_ptr.vmem [resolvable:$true] %s45
      %51 = dma.hbm_to_vmem [thread:$0]  %s44, 1024, %s46, [#allocation6], 128, 128, 8
    $region17: #{tpu_custom_call.1} parent=1 // pred_fallthru
      _
    // Predicated region
    $region18: #{tpu_custom_call.1} parent=1 // pred_check
      _
    $region19: #{tpu_custom_call.1} parent=1 // pred_check_branch
      %53 = sbr.rel (0) target = $region21
    $region20: #{tpu_custom_call.1} parent=1 // pred_region
      _
    $region21: #{tpu_custom_call.1} parent=1 // pred_fallthru
      _
    // Predicated region
    $region22: #{tpu_custom_call.1} parent=1 // pred_check
      _
    $region23: #{tpu_custom_call.1} parent=1 // pred_check_branch
      %55 = sbr.rel (0) target = $region25
    $region24: #{tpu_custom_call.1} parent=1 // pred_region
      %57 = dma.done [#allocation3], 128
    $region25: #{tpu_custom_call.1} parent=1 // pred_fallthru
      _
    // Predicated region
    $region26: #{tpu_custom_call.1} parent=1 // pred_check
      _
    $region27: #{tpu_custom_call.1} parent=1 // pred_check_branch
      %59 = sbr.rel (0) target = $region29
    $region28: #{tpu_custom_call.1} parent=1 // pred_region
      %61 = dma.done [#allocation6], 512
    $region29: #{tpu_custom_call.1} parent=1 // pred_fallthru
      _
    // Predicated region
    $region30: #{tpu_custom_call.1} parent=1 // pred_check
      _
    $region31: #{tpu_custom_call.1} parent=1 // pred_check_branch
      %63 = sbr.rel (0) target = $region33
    $region32: #{tpu_custom_call.1} parent=1 // pred_region
      %65 = dma.done [#allocation6], 1024
    $region33: #{tpu_custom_call.1} parent=1 // pred_fallthru
      _
    %v66 = vld [vmem:[#allocation2] sm:$0xff]
    %v67 = vld [vmem:[#allocation5] sm:$0xff]
    %v68 = vld [vmem:[#allocation5 + $0x8] sm:$0xff]
    %v69 = vld [vmem:[#allocation5 + $0x10] sm:$0xff]
    %v70 = vld [vmem:[#allocation5 + $0x18] sm:$0xff]
    %v71 = vld [vmem:[%s2] sm:$0x1]
    %v73 = vperm.slane %v71, 0
    %vm75 = vcmask 261120
    %v77 = vsel %vm75, %v66, 0
    %79 = vmatpush.msra.mxu0 0.0
    %80 = vmatpush.msra.mxu0 0.0
    %81 = vmatpush.msra.mxu0 0.0
    %82 = vmatpush.msra.mxu0 0.0
    %83 = vmatpush.msra.mxu0 0.0
    %84 = vmatpush.msra.mxu0 0.0
    %85 = vmatpush.msra.mxu0 0.0
    %86 = vmatpush.msra.mxu0 0.0
    %87 = vmatpush.msra.mxu0 0.0
    %88 = vmatpush.msra.mxu0 0.0
    %89 = vmatpush.msra.mxu0 0.0
    %90 = vmatpush.msra.mxu0 0.0
    %91 = vmatpush.msra.mxu0 %v70
    %92 = vmatpush.msra.mxu0 %v69
    %93 = vmatpush.msra.mxu0 %v68
    %94 = vmatpush.msra.mxu0 %v67
    %95 = vmatmul.f32.gmra.mxu0 %v77
    %v96 = vpop.f32.mrf.mxu0
    %v97 = vadd.f32 %v73, %v96
    %98 = vdwg.mxu0
    %v99 = vmax.f32 %v97, 0.0
    %v100 = vld [vmem:[#allocation7] sm:$0xff]
    %v101 = vld [vmem:[#allocation7 + $0x8] sm:$0xff]
    %v102 = vld [vmem:[#allocation7 + $0x10] sm:$0xff]
    %v103 = vld [vmem:[#allocation7 + $0x18] sm:$0xff]
    %v104 = vld [vmem:[#allocation7 + $0x20] sm:$0xff]
    %v105 = vld [vmem:[#allocation7 + $0x28] sm:$0xff]
    %v106 = vld [vmem:[#allocation7 + $0x30] sm:$0xff]
    %v107 = vld [vmem:[#allocation7 + $0x38] sm:$0xff]
    %v108 = vld [vmem:[%s4] sm:$0x1]
    %v110 = vperm.slane %v108, 0
    %vm112 = vcmask 523264
    %v114 = vsel %vm112, %v99, 0
    %116 = vmatpush.msra.mxu0 0.0
    %117 = vmatpush.msra.mxu0 0.0
    %118 = vmatpush.msra.mxu0 0.0
    %119 = vmatpush.msra.mxu0 0.0
    %120 = vmatpush.msra.mxu0 0.0
    %121 = vmatpush.msra.mxu0 0.0
    %122 = vmatpush.msra.mxu0 0.0
    %123 = vmatpush.msra.mxu0 0.0
    %124 = vmatpush.msra.mxu0 %v107
    %125 = vmatpush.msra.mxu0 %v106
    %126 = vmatpush.msra.mxu0 %v105
    %127 = vmatpush.msra.mxu0 %v104
    %128 = vmatpush.msra.mxu0 %v103
    %129 = vmatpush.msra.mxu0 %v102
    %130 = vmatpush.msra.mxu0 %v101
    %131 = vmatpush.msra.mxu0 %v100
    %132 = vmatmul.f32.gmra.mxu0 %v114
    %v133 = vpop.f32.mrf.mxu0
    %v134 = vadd.f32 %v110, %v133
    %135 = vdwg.mxu0
    %v136 = vmax.f32 %v134, 0.0
    %137 = vst [vmem:[#allocation8] sm:$0xff] %v136
    // Predicated region
    $region34: #{tpu_custom_call.1} parent=1 // pred_check
      _
    $region35: #{tpu_custom_call.1} parent=1 // pred_check_branch
      %139 = sbr.rel (0) target = $region37
    $region36: #{tpu_custom_call.1} parent=1 // pred_region
      %141 = vsyncadd [#allocation4], 0
      %s143 = sshll.u32 [#allocation8], 4
      %s144 = int_to_ptr.vmem [resolvable:$true] %s143
      %s145 = sshll.u32 %s5, 4
      %s146 = int_to_ptr.hbm [resolvable:$true] %s145
      %148 = dma.vmem_to_hbm [thread:$0]  %s144, 128, %s146, [#allocation4]
    $region37: #{tpu_custom_call.1} parent=1 // pred_fallthru
      _
    // Predicated region
    $region38: #{tpu_custom_call.1} parent=1 // pred_check
      _
    $region39: #{tpu_custom_call.1} parent=1 // pred_check_branch
      %150 = sbr.rel (0) target = $region41
    $region40: #{tpu_custom_call.1} parent=1 // pred_region
      %152 = dma.done [#allocation4], 128
    $region41: #{tpu_custom_call.1} parent=1 // pred_fallthru
      _
    %153 = vsyncpa [#allocation3], 1
    %154 = vsyncpa [#allocation6], 1
    %155 = vsyncpa [#allocation4], 1

</llo_original>
